<compile_context>
chip_gen: v7x
topology: tpu7x:2x2x1
jax: 0.10.0
libtpu: 0.0.40
codegen_flags: <defaults>
</compile_context>

<pallas_src>
import jax
import jax.numpy as jnp
import numpy as np
from jax.experimental import pallas as pl
from jax.experimental.pallas import tpu as pltpu


OUT_C = 16
KERNEL_SIZE = 5
IN_C = 1
HIDDEN = 128
IN_FEATS = 2
OUT_FEATS = KERNEL_SIZE * KERNEL_SIZE * IN_C * OUT_C   # 400
OUT_PAD = 512                                          # 400 padded to 4*128 lanes


def _pos2weight_kernel(x_ref, w1_ref, b1_ref, w2_ref, b2_ref, o_ref):
    # Fused MLP hot path on a (TM, *) tile resident in VMEM.
    x = x_ref[...]                                   # (TM, 2)
    w1 = w1_ref[...]                                 # (2, 128)

    # Layer 1 on the VPU: two lane-broadcast FMAs instead of a K=2 MXU pass.
    h = x[:, 0:1] * w1[0:1, :] + x[:, 1:2] * w1[1:2, :] + b1_ref[...]
    h = jnp.maximum(h, 0.0)                          # (TM, 128) ReLU

    # Layer 2 on the MXU: (TM,128) @ (128,512), f32 accumulate, lane-dense N.
    y = jnp.dot(h, w2_ref[...], preferred_element_type=jnp.float32)
    o_ref[...] = (y + b2_ref[...]).astype(o_ref.dtype)


def pos2weight_forward(x, w1, b1, w2, b2, *, tm=2048):
    """x: (N, 2) f32.  w1: (2,128), b1: (128,), w2: (128,400), b2: (400,).

    Returns (N, 400) f32.  N may be any positive size (padded internally).
    """
    n, in_f = x.shape
    assert in_f == IN_FEATS

    # Zero-pad layer-2 params to 512 output lanes (extra columns are discarded).
    w2_p = jnp.zeros((HIDDEN, OUT_PAD), jnp.float32).at[:, :OUT_FEATS].set(w2)
    b2_p = jnp.zeros((1, OUT_PAD), jnp.float32).at[0, :OUT_FEATS].set(b2)
    b1_2d = b1.reshape(1, HIDDEN)

    # Row tile: cap at the sublane-aligned row count for small inputs, keep a
    # multiple of 8, then pad N up to a multiple of the tile.
    n_rows8 = ((n + 7) // 8) * 8
    tm_eff = min(tm, n_rows8)
    tm_eff = ((tm_eff + 7) // 8) * 8
    n_pad = pl.cdiv(n, tm_eff) * tm_eff
    x_p = x if n_pad == n else jnp.pad(x, ((0, n_pad - n), (0, 0)))

    grid = (n_pad // tm_eff,)
    out = pl.pallas_call(
        _pos2weight_kernel,
        out_shape=jax.ShapeDtypeStruct((n_pad, OUT_PAD), jnp.float32),
        grid_spec=pltpu.PrefetchScalarGridSpec(
            num_scalar_prefetch=0,
            grid=grid,
            in_specs=[
                pl.BlockSpec((tm_eff, IN_FEATS), lambda i: (i, 0)),   # x tile
                pl.BlockSpec((IN_FEATS, HIDDEN), lambda i: (0, 0)),   # W1 (full)
                pl.BlockSpec((1, HIDDEN), lambda i: (0, 0)),          # b1
                pl.BlockSpec((HIDDEN, OUT_PAD), lambda i: (0, 0)),    # W2 (padded)
                pl.BlockSpec((1, OUT_PAD), lambda i: (0, 0)),         # b2 (padded)
            ],
            out_specs=pl.BlockSpec((tm_eff, OUT_PAD), lambda i: (i, 0)),
        ),
        compiler_params=pltpu.CompilerParams(
            dimension_semantics=("parallel",),   # shards rows across cores (v7x)
        ),
    )(x_p, w1, b1_2d, w2_p, b2_p)

    # Slice away row padding and the 400->512 lane padding.
    return out[:n, :OUT_FEATS]


def init_params(key):
    """Deterministic init mimicking PyTorch nn.Linear default U[-1/sqrt(fan_in), +1/sqrt(fan_in)]."""
    k1, k2, k3, k4 = jax.random.split(key, 4)
    bound1 = 1.0 / np.sqrt(IN_FEATS)
    bound2 = 1.0 / np.sqrt(HIDDEN)
    # stored as (in_features, out_features)
    w1 = jax.random.uniform(k1, (IN_FEATS, HIDDEN), jnp.float32, -bound1, bound1)
    b1 = jax.random.uniform(k2, (HIDDEN,), jnp.float32, -bound1, bound1)
    w2 = jax.random.uniform(k3, (HIDDEN, OUT_FEATS), jnp.float32, -bound2, bound2)
    b2 = jax.random.uniform(k4, (OUT_FEATS,), jnp.float32, -bound2, bound2)
    return w1, b1, w2, b2


def pos2weight_reference(x, w1, b1, w2, b2):
    h = jnp.maximum(x @ w1 + b1, 0.0)
    return h @ w2 + b2


if __name__ == "__main__":
    key = jax.random.PRNGKey(0)
    kp, kx = jax.random.split(key)
    w1, b1, w2, b2 = init_params(kp)

    # N positions (scale^2 * patch positions in LapSRN meta-upscale); use a
    # small, deliberately non-multiple-of-8 count to exercise the padding path.
    N = 300
    x = jax.random.uniform(kx, (N, IN_FEATS), jnp.float32)   # (N, 2) relative positions

    out = pos2weight_forward(x, w1, b1, w2, b2)
    out = jax.block_until_ready(out)

    ref = pos2weight_reference(x, w1, b1, w2, b2)
    assert out.shape == (N, OUT_FEATS)
    np.testing.assert_allclose(np.asarray(out), np.asarray(ref), rtol=1e-5, atol=1e-5)

    print("KERNEL_OK")
</pallas_src>

<mosaic_0001>
module attributes {stable_mosaic.version = 11 : i64} {
  func.func @_pos2weight_kernel(%arg0: i32, %arg1: memref<304x2xf32, #tpu.memory_space<vmem>>, %arg2: memref<2x128xf32, #tpu.memory_space<vmem>>, %arg3: memref<1x128xf32, #tpu.memory_space<vmem>>, %arg4: memref<128x512xf32, #tpu.memory_space<vmem>>, %arg5: memref<1x512xf32, #tpu.memory_space<vmem>>, %arg6: memref<304x512xf32, #tpu.memory_space<vmem>>) attributes {dimension_semantics = [#tpu.dimension_semantics<parallel>], iteration_bounds = array<i64: 1>, scalar_prefetch = 0 : i64, scratch_operands = 0 : i64, tpu.core_type = #tpu.core_type<tc>, window_params = [{transform_indices = @transform_0, window_bounds = array<i64: 304, 2>}, {pipeline_mode = #tpu.pipeline_mode<synchronous>, transform_indices = @transform_1, window_bounds = array<i64: 2, 128>}, {pipeline_mode = #tpu.pipeline_mode<synchronous>, transform_indices = @transform_2, window_bounds = array<i64: 1, 128>}, {pipeline_mode = #tpu.pipeline_mode<synchronous>, transform_indices = @transform_3, window_bounds = array<i64: 128, 512>}, {pipeline_mode = #tpu.pipeline_mode<synchronous>, transform_indices = @transform_4, window_bounds = array<i64: 1, 512>}, {transform_indices = @transform_5, window_bounds = array<i64: 304, 512>}]} {
    %c0 = arith.constant 0 : index
    %c0_0 = arith.constant 0 : index
    %0 = vector.load %arg1[%c0, %c0_0] : memref<304x2xf32, #tpu.memory_space<vmem>>, vector<304x2xf32>
    %c0_1 = arith.constant 0 : index
    %c0_2 = arith.constant 0 : index
    %1 = vector.load %arg2[%c0_1, %c0_2] : memref<2x128xf32, #tpu.memory_space<vmem>>, vector<2x128xf32>
    %2 = vector.extract_strided_slice %0 {offsets = [0, 0], sizes = [304, 1], strides = [1, 1]} : vector<304x2xf32> to vector<304x1xf32>
    %3 = vector.extract_strided_slice %1 {offsets = [0, 0], sizes = [1, 128], strides = [1, 1]} : vector<2x128xf32> to vector<1x128xf32>
    %4 = vector.broadcast %2 : vector<304x1xf32> to vector<304x128xf32>
    %5 = vector.broadcast %3 : vector<1x128xf32> to vector<304x128xf32>
    %6 = arith.mulf %4, %5 : vector<304x128xf32>
    %7 = vector.extract_strided_slice %0 {offsets = [0, 1], sizes = [304, 1], strides = [1, 1]} : vector<304x2xf32> to vector<304x1xf32>
    %8 = vector.extract_strided_slice %1 {offsets = [1, 0], sizes = [1, 128], strides = [1, 1]} : vector<2x128xf32> to vector<1x128xf32>
    %9 = vector.broadcast %7 : vector<304x1xf32> to vector<304x128xf32>
    %10 = vector.broadcast %8 : vector<1x128xf32> to vector<304x128xf32>
    %11 = arith.mulf %9, %10 : vector<304x128xf32>
    %12 = arith.addf %6, %11 : vector<304x128xf32>
    %c0_3 = arith.constant 0 : index
    %c0_4 = arith.constant 0 : index
    %13 = vector.load %arg3[%c0_3, %c0_4] : memref<1x128xf32, #tpu.memory_space<vmem>>, vector<1x128xf32>
    %14 = vector.broadcast %13 : vector<1x128xf32> to vector<304x128xf32>
    %15 = arith.addf %12, %14 : vector<304x128xf32>
    %cst = arith.constant 0.000000e+00 : f32
    %16 = vector.broadcast %cst : f32 to vector<304x128xf32>
    %17 = arith.maximumf %15, %16 : vector<304x128xf32>
    %c0_5 = arith.constant 0 : index
    %c0_6 = arith.constant 0 : index
    %18 = vector.load %arg4[%c0_5, %c0_6] : memref<128x512xf32, #tpu.memory_space<vmem>>, vector<128x512xf32>
    %cst_7 = arith.constant dense<0.000000e+00> : vector<304x512xf32>
    %19 = tpu.matmul %17, %18, %cst_7 {dimension_numbers = #tpu.dot_dimension_numbers<[1], [0], [0], [1], [0, 0, 1, 1], [], []>} : vector<304x128xf32>, vector<128x512xf32>, vector<304x512xf32> -> vector<304x512xf32>
    %c0_8 = arith.constant 0 : index
    %c0_9 = arith.constant 0 : index
    %20 = vector.load %arg5[%c0_8, %c0_9] : memref<1x512xf32, #tpu.memory_space<vmem>>, vector<1x512xf32>
    %21 = vector.broadcast %20 : vector<1x512xf32> to vector<304x512xf32>
    %22 = arith.addf %19, %21 : vector<304x512xf32>
    %c0_10 = arith.constant 0 : index
    %c0_11 = arith.constant 0 : index
    %23 = vector.load %arg6[%c0_10, %c0_11] : memref<304x512xf32, #tpu.memory_space<vmem>>, vector<304x512xf32>
    tpu.vector_store %arg6[%c0_10, %c0_11], %22 {strides = array<i32>} : memref<304x512xf32, #tpu.memory_space<vmem>>, vector<304x512xf32>,
    return
  }
  func.func @transform_0(%arg0: i32) -> (i32, i32) {
    %c0_i32 = arith.constant 0 : i32
    %c0_i32_0 = arith.constant 0 : i32
    return %arg0, %c0_i32 : i32, i32
  }
  func.func @transform_1(%arg0: i32) -> (i32, i32) {
    %c0_i32 = arith.constant 0 : i32
    %c0_i32_0 = arith.constant 0 : i32
    %c0_i32_1 = arith.constant 0 : i32
    return %c0_i32, %c0_i32_0 : i32, i32
  }
  func.func @transform_2(%arg0: i32) -> (i32, i32) {
    %c0_i32 = arith.constant 0 : i32
    %c0_i32_0 = arith.constant 0 : i32
    %c0_i32_1 = arith.constant 0 : i32
    return %c0_i32, %c0_i32_0 : i32, i32
  }
  func.func @transform_3(%arg0: i32) -> (i32, i32) {
    %c0_i32 = arith.constant 0 : i32
    %c0_i32_0 = arith.constant 0 : i32
    %c0_i32_1 = arith.constant 0 : i32
    return %c0_i32, %c0_i32_0 : i32, i32
  }
  func.func @transform_4(%arg0: i32) -> (i32, i32) {
    %c0_i32 = arith.constant 0 : i32
    %c0_i32_0 = arith.constant 0 : i32
    %c0_i32_1 = arith.constant 0 : i32
    return %c0_i32, %c0_i32_0 : i32, i32
  }
  func.func @transform_5(%arg0: i32) -> (i32, i32) {
    %c0_i32 = arith.constant 0 : i32
    %c0_i32_0 = arith.constant 0 : i32
    return %arg0, %c0_i32 : i32, i32
  }
}

</mosaic_0001>

<llo_original>
// kernel: tpu_custom_call.1
$region0: #{tpu_custom_call.1}
  #allocation0 [shape = 'u32[]', space=smem, size = 0x4, offset = 0x4, fixed_abs, tag = 'smem constant byte address 0x4 - core index']
  #allocation1 [shape = 'u32[144,128]{1,0:T(1,128)}', space=vmem, size = 0x12000, scoped, tag = 'internal scratch']
  %s0 = inlined_call_operand.vmem [shape: f32[304,2], index: 0, kind: input, shape index: {}]
  %s1 = inlined_call_operand.vmem [shape: f32[2,128], index: 1, kind: input, shape index: {}]
  %s2 = inlined_call_operand.vmem [shape: f32[1,128], index: 2, kind: input, shape index: {}]
  %s3 = inlined_call_operand.hbm [shape: f32[128,512], index: 3, kind: input, shape index: {}]
  %s4 = inlined_call_operand.vmem [shape: f32[1,512], index: 4, kind: input, shape index: {}]
  %s5 = inlined_call_operand.hbm [shape: f32[304,512], index: 5, kind: output, shape index: {}]
  %s6 = sld [smem:[#allocation0]]
  $region34: #{tpu_custom_call.1} parent=0
    _
  %s8 = ssub.s32 1, %s6
  %s9 = scalar_select 0, %s8, %s6
  $region1: #{tpu_custom_call.1} parent=0
    #allocation2 [shape = 'u8[262144]{0}', space=vmem, size = 0x40000, scoped, tag = 'input window, operand 3, single buffered']
    #allocation3 [shape = 's32[1]{0}', space=sflag, size = 0x4, scoped, tag = 'scoped memory for tpu_custom_call.1']
    #allocation4 [shape = 's32[1]{0}', space=sflag, size = 0x4, scoped, tag = 'scoped memory for tpu_custom_call.1']
    #allocation5 [shape = 'u8[622592]{0}', space=vmem, size = 0x98000, scoped, tag = 'output window, operand 0, single buffered']
    %10 = vsyncpa [#allocation3], 0
    %11 = vsyncpa [#allocation4], 0
    // Predicated region
    $region2: #{tpu_custom_call.1} parent=1 // pred_check
      _
    $region3: #{tpu_custom_call.1} parent=1 // pred_check_branch
      %13 = sbr.rel (0) target = $region5
    $region4: #{tpu_custom_call.1} parent=1 // pred_region
      _
    $region5: #{tpu_custom_call.1} parent=1 // pred_fallthru
      _
    // Predicated region
    $region6: #{tpu_custom_call.1} parent=1 // pred_check
      _
    $region7: #{tpu_custom_call.1} parent=1 // pred_check_branch
      %15 = sbr.rel (0) target = $region9
    $region8: #{tpu_custom_call.1} parent=1 // pred_region
      _
    $region9: #{tpu_custom_call.1} parent=1 // pred_fallthru
      _
    // Predicated region
    $region10: #{tpu_custom_call.1} parent=1 // pred_check
      _
    $region11: #{tpu_custom_call.1} parent=1 // pred_check_branch
      %17 = sbr.rel (0) target = $region13
    $region12: #{tpu_custom_call.1} parent=1 // pred_region
      _
    $region13: #{tpu_custom_call.1} parent=1 // pred_fallthru
      _
    // Predicated region
    $region14: #{tpu_custom_call.1} parent=1 // pred_check
      _
    $region15: #{tpu_custom_call.1} parent=1 // pred_check_branch
      %19 = sbr.rel (0) target = $region17
    $region16: #{tpu_custom_call.1} parent=1 // pred_region
      %s21 = ssub.s32 8192, 8192
      %22 = vsyncadd [#allocation3], %s21
      %s23 = sshll.u32 [#allocation2], 4
      %s24 = int_to_ptr.vmem [resolvable:$true] %s23
      %29 = dma.hbm_to_vmem [thread:$0]  %s3, 8192, %s24, [#allocation3], 512, 512, 32
    $region17: #{tpu_custom_call.1} parent=1 // pred_fallthru
      _
    // Predicated region
    $region18: #{tpu_custom_call.1} parent=1 // pred_check
      _
    $region19: #{tpu_custom_call.1} parent=1 // pred_check_branch
      %31 = sbr.rel (0) target = $region21
    $region20: #{tpu_custom_call.1} parent=1 // pred_region
      _
    $region21: #{tpu_custom_call.1} parent=1 // pred_fallthru
      _
    // Predicated region
    $region22: #{tpu_custom_call.1} parent=1 // pred_check
      _
    $region23: #{tpu_custom_call.1} parent=1 // pred_check_branch
      %33 = sbr.rel (0) target = $region25
    $region24: #{tpu_custom_call.1} parent=1 // pred_region
      %34 = dma.done [#allocation3], 8192
    $region25: #{tpu_custom_call.1} parent=1 // pred_fallthru
      _
    %v35 = vld [vmem:[%s0] sm:$0xff]
    %v36 = vld [vmem:[%s0 + $0x8] sm:$0xff]
    %v37 = vld [vmem:[%s0 + $0x10] sm:$0xff]
    %v38 = vld [vmem:[%s0 + $0x18] sm:$0xff]
    %v39 = vld [vmem:[%s0 + $0x20] sm:$0xff]
    %v40 = vld [vmem:[%s0 + $0x28] sm:$0xff]
    %v41 = vld [vmem:[%s0 + $0x30] sm:$0xff]
    %v42 = vld [vmem:[%s0 + $0x38] sm:$0xff]
    %v43 = vld [vmem:[%s0 + $0x40] sm:$0xff]
    %v44 = vld [vmem:[%s0 + $0x48] sm:$0xff]
    %v45 = vld [vmem:[%s0 + $0x50] sm:$0xff]
    %v46 = vld [vmem:[%s0 + $0x58] sm:$0xff]
    %v47 = vld [vmem:[%s0 + $0x60] sm:$0xff]
    %v48 = vld [vmem:[%s0 + $0x68] sm:$0xff]
    %v49 = vld [vmem:[%s0 + $0x70] sm:$0xff]
    %v50 = vld [vmem:[%s0 + $0x78] sm:$0xff]
    %v51 = vld [vmem:[%s0 + $0x80] sm:$0xff]
    %v52 = vld [vmem:[%s0 + $0x88] sm:$0xff]
    %v53 = vld [vmem:[%s0 + $0x90] sm:$0xff]
    %v54 = vld [vmem:[%s0 + $0x98] sm:$0xff]
    %v55 = vld [vmem:[%s0 + $0xa0] sm:$0xff]
    %v56 = vld [vmem:[%s0 + $0xa8] sm:$0xff]
    %v57 = vld [vmem:[%s0 + $0xb0] sm:$0xff]
    %v58 = vld [vmem:[%s0 + $0xb8] sm:$0xff]
    %v59 = vld [vmem:[%s0 + $0xc0] sm:$0xff]
    %v60 = vld [vmem:[%s0 + $0xc8] sm:$0xff]
    %v61 = vld [vmem:[%s0 + $0xd0] sm:$0xff]
    %v62 = vld [vmem:[%s0 + $0xd8] sm:$0xff]
    %v63 = vld [vmem:[%s0 + $0xe0] sm:$0xff]
    %v64 = vld [vmem:[%s0 + $0xe8] sm:$0xff]
    %v65 = vld [vmem:[%s0 + $0xf0] sm:$0xff]
    %v66 = vld [vmem:[%s0 + $0xf8] sm:$0xff]
    %v67 = vld [vmem:[%s0 + $0x100] sm:$0xff]
    %v68 = vld [vmem:[%s0 + $0x108] sm:$0xff]
    %v69 = vld [vmem:[%s0 + $0x110] sm:$0xff]
    %v70 = vld [vmem:[%s0 + $0x118] sm:$0xff]
    %v71 = vld [vmem:[%s0 + $0x120] sm:$0xff]
    %v72 = vld [vmem:[%s0 + $0x128] sm:$0xff]
    %v73 = vld [vmem:[%s1] sm:$0x3]
    %75 = vset.pattern.permute.xlu0 0
    %76 = vperm.xlu0 %75, %v35
    %v77 = vpop.permute.xlu0 %76
    %80 = vset.pattern.permute.xlu0 0
    %81 = vperm.xlu0 %80, %v36
    %v82 = vpop.permute.xlu0 %81
    %85 = vset.pattern.permute.xlu0 0
    %86 = vperm.xlu0 %85, %v37
    %v87 = vpop.permute.xlu0 %86
    %90 = vset.pattern.permute.xlu0 0
    %91 = vperm.xlu0 %90, %v38
    %v92 = vpop.permute.xlu0 %91
    %95 = vset.pattern.permute.xlu0 0
    %96 = vperm.xlu0 %95, %v39
    %v97 = vpop.permute.xlu0 %96
    %100 = vset.pattern.permute.xlu0 0
    %101 = vperm.xlu0 %100, %v40
    %v102 = vpop.permute.xlu0 %101
    %105 = vset.pattern.permute.xlu0 0
    %106 = vperm.xlu0 %105, %v41
    %v107 = vpop.permute.xlu0 %106
    %110 = vset.pattern.permute.xlu0 0
    %111 = vperm.xlu0 %110, %v42
    %v112 = vpop.permute.xlu0 %111
    %115 = vset.pattern.permute.xlu0 0
    %116 = vperm.xlu0 %115, %v43
    %v117 = vpop.permute.xlu0 %116
    %120 = vset.pattern.permute.xlu0 0
    %121 = vperm.xlu0 %120, %v44
    %v122 = vpop.permute.xlu0 %121
    %125 = vset.pattern.permute.xlu0 0
    %126 = vperm.xlu0 %125, %v45
    %v127 = vpop.permute.xlu0 %126
    %130 = vset.pattern.permute.xlu0 0
    %131 = vperm.xlu0 %130, %v46
    %v132 = vpop.permute.xlu0 %131
    %135 = vset.pattern.permute.xlu0 0
    %136 = vperm.xlu0 %135, %v47
    %v137 = vpop.permute.xlu0 %136
    %140 = vset.pattern.permute.xlu0 0
    %141 = vperm.xlu0 %140, %v48
    %v142 = vpop.permute.xlu0 %141
    %145 = vset.pattern.permute.xlu0 0
    %146 = vperm.xlu0 %145, %v49
    %v147 = vpop.permute.xlu0 %146
    %150 = vset.pattern.permute.xlu0 0
    %151 = vperm.xlu0 %150, %v50
    %v152 = vpop.permute.xlu0 %151
    %155 = vset.pattern.permute.xlu0 0
    %156 = vperm.xlu0 %155, %v51
    %v157 = vpop.permute.xlu0 %156
    %160 = vset.pattern.permute.xlu0 0
    %161 = vperm.xlu0 %160, %v52
    %v162 = vpop.permute.xlu0 %161
    %165 = vset.pattern.permute.xlu0 0
    %166 = vperm.xlu0 %165, %v53
    %v167 = vpop.permute.xlu0 %166
    %170 = vset.pattern.permute.xlu0 0
    %171 = vperm.xlu0 %170, %v54
    %v172 = vpop.permute.xlu0 %171
    %175 = vset.pattern.permute.xlu0 0
    %176 = vperm.xlu0 %175, %v55
    %v177 = vpop.permute.xlu0 %176
    %180 = vset.pattern.permute.xlu0 0
    %181 = vperm.xlu0 %180, %v56
    %v182 = vpop.permute.xlu0 %181
    %185 = vset.pattern.permute.xlu0 0
    %186 = vperm.xlu0 %185, %v57
    %v187 = vpop.permute.xlu0 %186
    %190 = vset.pattern.permute.xlu0 0
    %191 = vperm.xlu0 %190, %v58
    %v192 = vpop.permute.xlu0 %191
    %195 = vset.pattern.permute.xlu0 0
    %196 = vperm.xlu0 %195, %v59
    %v197 = vpop.permute.xlu0 %196
    %200 = vset.pattern.permute.xlu0 0
    %201 = vperm.xlu0 %200, %v60
    %v202 = vpop.permute.xlu0 %201
    %205 = vset.pattern.permute.xlu0 0
    %206 = vperm.xlu0 %205, %v61
    %v207 = vpop.permute.xlu0 %206
    %210 = vset.pattern.permute.xlu0 0
    %211 = vperm.xlu0 %210, %v62
    %v212 = vpop.permute.xlu0 %211
    %215 = vset.pattern.permute.xlu0 0
    %216 = vperm.xlu0 %215, %v63
    %v217 = vpop.permute.xlu0 %216
    %220 = vset.pattern.permute.xlu0 0
    %221 = vperm.xlu0 %220, %v64
    %v222 = vpop.permute.xlu0 %221
    %225 = vset.pattern.permute.xlu0 0
    %226 = vperm.xlu0 %225, %v65
    %v227 = vpop.permute.xlu0 %226
    %230 = vset.pattern.permute.xlu0 0
    %231 = vperm.xlu0 %230, %v66
    %v232 = vpop.permute.xlu0 %231
    %235 = vset.pattern.permute.xlu0 0
    %236 = vperm.xlu0 %235, %v67
    %v237 = vpop.permute.xlu0 %236
    %240 = vset.pattern.permute.xlu0 0
    %241 = vperm.xlu0 %240, %v68
    %v242 = vpop.permute.xlu0 %241
    %245 = vset.pattern.permute.xlu0 0
    %246 = vperm.xlu0 %245, %v69
    %v247 = vpop.permute.xlu0 %246
    %250 = vset.pattern.permute.xlu0 0
    %251 = vperm.xlu0 %250, %v70
    %v252 = vpop.permute.xlu0 %251
    %255 = vset.pattern.permute.xlu0 0
    %256 = vperm.xlu0 %255, %v71
    %v257 = vpop.permute.xlu0 %256
    %260 = vset.pattern.permute.xlu0 0
    %261 = vperm.xlu0 %260, %v72
    %v262 = vpop.permute.xlu0 %261
    %v264 = vlaneseq
    %v265 = vshrl.u32 %v264, 7
    %v266 = vsub.s32 0, %v265
    %v267 = vrot.slane %v73, %v266
    %v268 = vmul.f32 %v77, %v267
    %v269 = vmul.f32 %v82, %v267
    %v270 = vmul.f32 %v87, %v267
    %v271 = vmul.f32 %v92, %v267
    %v272 = vmul.f32 %v97, %v267
    %v273 = vmul.f32 %v102, %v267
    %v274 = vmul.f32 %v107, %v267
    %v275 = vmul.f32 %v112, %v267
    %v276 = vmul.f32 %v117, %v267
    %v277 = vmul.f32 %v122, %v267
    %v278 = vmul.f32 %v127, %v267
    %v279 = vmul.f32 %v132, %v267
    %v280 = vmul.f32 %v137, %v267
    %v281 = vmul.f32 %v142, %v267
    %v282 = vmul.f32 %v147, %v267
    %v283 = vmul.f32 %v152, %v267
    %v284 = vmul.f32 %v157, %v267
    %v285 = vmul.f32 %v162, %v267
    %v286 = vmul.f32 %v167, %v267
    %v287 = vmul.f32 %v172, %v267
    %v288 = vmul.f32 %v177, %v267
    %v289 = vmul.f32 %v182, %v267
    %v290 = vmul.f32 %v187, %v267
    %v291 = vmul.f32 %v192, %v267
    %v292 = vmul.f32 %v197, %v267
    %v293 = vmul.f32 %v202, %v267
    %v294 = vmul.f32 %v207, %v267
    %v295 = vmul.f32 %v212, %v267
    %v296 = vmul.f32 %v217, %v267
    %v297 = vmul.f32 %v222, %v267
    %v298 = vmul.f32 %v227, %v267
    %v299 = vmul.f32 %v232, %v267
    %v300 = vmul.f32 %v237, %v267
    %v301 = vmul.f32 %v242, %v267
    %v302 = vmul.f32 %v247, %v267
    %v303 = vmul.f32 %v252, %v267
    %v304 = vmul.f32 %v257, %v267
    %v305 = vmul.f32 %v262, %v267
    %306 = vset.pattern.permute.xlu0 1
    %307 = vperm.xlu0 %306, %v35
    %v308 = vpop.permute.xlu0 %307
    %310 = vset.pattern.permute.xlu0 1
    %311 = vperm.xlu0 %310, %v36
    %v312 = vpop.permute.xlu0 %311
    %314 = vset.pattern.permute.xlu0 1
    %315 = vperm.xlu0 %314, %v37
    %v316 = vpop.permute.xlu0 %315
    %318 = vset.pattern.permute.xlu0 1
    %319 = vperm.xlu0 %318, %v38
    %v320 = vpop.permute.xlu0 %319
    %322 = vset.pattern.permute.xlu0 1
    %323 = vperm.xlu0 %322, %v39
    %v324 = vpop.permute.xlu0 %323
    %326 = vset.pattern.permute.xlu0 1
    %327 = vperm.xlu0 %326, %v40
    %v328 = vpop.permute.xlu0 %327
    %330 = vset.pattern.permute.xlu0 1
    %331 = vperm.xlu0 %330, %v41
    %v332 = vpop.permute.xlu0 %331
    %334 = vset.pattern.permute.xlu0 1
    %335 = vperm.xlu0 %334, %v42
    %v336 = vpop.permute.xlu0 %335
    %338 = vset.pattern.permute.xlu0 1
    %339 = vperm.xlu0 %338, %v43
    %v340 = vpop.permute.xlu0 %339
    %342 = vset.pattern.permute.xlu0 1
    %343 = vperm.xlu0 %342, %v44
    %v344 = vpop.permute.xlu0 %343
    %346 = vset.pattern.permute.xlu0 1
    %347 = vperm.xlu0 %346, %v45
    %v348 = vpop.permute.xlu0 %347
    %350 = vset.pattern.permute.xlu0 1
    %351 = vperm.xlu0 %350, %v46
    %v352 = vpop.permute.xlu0 %351
    %354 = vset.pattern.permute.xlu0 1
    %355 = vperm.xlu0 %354, %v47
    %v356 = vpop.permute.xlu0 %355
    %358 = vset.pattern.permute.xlu0 1
    %359 = vperm.xlu0 %358, %v48
    %v360 = vpop.permute.xlu0 %359
    %362 = vset.pattern.permute.xlu0 1
    %363 = vperm.xlu0 %362, %v49
    %v364 = vpop.permute.xlu0 %363
    %366 = vset.pattern.permute.xlu0 1
    %367 = vperm.xlu0 %366, %v50
    %v368 = vpop.permute.xlu0 %367
    %370 = vset.pattern.permute.xlu0 1
    %371 = vperm.xlu0 %370, %v51
    %v372 = vpop.permute.xlu0 %371
    %374 = vset.pattern.permute.xlu0 1
    %375 = vperm.xlu0 %374, %v52
    %v376 = vpop.permute.xlu0 %375
    %378 = vset.pattern.permute.xlu0 1
    %379 = vperm.xlu0 %378, %v53
    %v380 = vpop.permute.xlu0 %379
    %382 = vset.pattern.permute.xlu0 1
    %383 = vperm.xlu0 %382, %v54
    %v384 = vpop.permute.xlu0 %383
    %386 = vset.pattern.permute.xlu0 1
    %387 = vperm.xlu0 %386, %v55
    %v388 = vpop.permute.xlu0 %387
    %390 = vset.pattern.permute.xlu0 1
    %391 = vperm.xlu0 %390, %v56
    %v392 = vpop.permute.xlu0 %391
    %394 = vset.pattern.permute.xlu0 1
    %395 = vperm.xlu0 %394, %v57
    %v396 = vpop.permute.xlu0 %395
    %398 = vset.pattern.permute.xlu0 1
    %399 = vperm.xlu0 %398, %v58
    %v400 = vpop.permute.xlu0 %399
    %402 = vset.pattern.permute.xlu0 1
    %403 = vperm.xlu0 %402, %v59
    %v404 = vpop.permute.xlu0 %403
    %406 = vset.pattern.permute.xlu0 1
    %407 = vperm.xlu0 %406, %v60
    %v408 = vpop.permute.xlu0 %407
    %410 = vset.pattern.permute.xlu0 1
    %411 = vperm.xlu0 %410, %v61
    %v412 = vpop.permute.xlu0 %411
    %414 = vset.pattern.permute.xlu0 1
    %415 = vperm.xlu0 %414, %v62
    %v416 = vpop.permute.xlu0 %415
    %418 = vset.pattern.permute.xlu0 1
    %419 = vperm.xlu0 %418, %v63
    %v420 = vpop.permute.xlu0 %419
    %422 = vset.pattern.permute.xlu0 1
    %423 = vperm.xlu0 %422, %v64
    %v424 = vpop.permute.xlu0 %423
    %426 = vset.pattern.permute.xlu0 1
    %427 = vperm.xlu0 %426, %v65
    %v428 = vpop.permute.xlu0 %427
    %430 = vset.pattern.permute.xlu0 1
    %431 = vperm.xlu0 %430, %v66
    %v432 = vpop.permute.xlu0 %431
    %434 = vset.pattern.permute.xlu0 1
    %435 = vperm.xlu0 %434, %v67
    %v436 = vpop.permute.xlu0 %435
    %438 = vset.pattern.permute.xlu0 1
    %439 = vperm.xlu0 %438, %v68
    %v440 = vpop.permute.xlu0 %439
    %442 = vset.pattern.permute.xlu0 1
    %443 = vperm.xlu0 %442, %v69
    %v444 = vpop.permute.xlu0 %443
    %446 = vset.pattern.permute.xlu0 1
    %447 = vperm.xlu0 %446, %v70
    %v448 = vpop.permute.xlu0 %447
    %450 = vset.pattern.permute.xlu0 1
    %451 = vperm.xlu0 %450, %v71
    %v452 = vpop.permute.xlu0 %451
    %454 = vset.pattern.permute.xlu0 1
    %455 = vperm.xlu0 %454, %v72
    %v456 = vpop.permute.xlu0 %455
    %v458 = vlaneseq
    %v459 = vshrl.u32 %v458, 7
    %v460 = vsub.s32 1, %v459
    %v461 = vrot.slane %v73, %v460
    %v462 = vmul.f32 %v308, %v461
    %v463 = vmul.f32 %v312, %v461
    %v464 = vmul.f32 %v316, %v461
    %v465 = vmul.f32 %v320, %v461
    %v466 = vmul.f32 %v324, %v461
    %v467 = vmul.f32 %v328, %v461
    %v468 = vmul.f32 %v332, %v461
    %v469 = vmul.f32 %v336, %v461
    %v470 = vmul.f32 %v340, %v461
    %v471 = vmul.f32 %v344, %v461
    %v472 = vmul.f32 %v348, %v461
    %v473 = vmul.f32 %v352, %v461
    %v474 = vmul.f32 %v356, %v461
    %v475 = vmul.f32 %v360, %v461
    %v476 = vmul.f32 %v364, %v461
    %v477 = vmul.f32 %v368, %v461
    %v478 = vmul.f32 %v372, %v461
    %v479 = vmul.f32 %v376, %v461
    %v480 = vmul.f32 %v380, %v461
    %v481 = vmul.f32 %v384, %v461
    %v482 = vmul.f32 %v388, %v461
    %v483 = vmul.f32 %v392, %v461
    %v484 = vmul.f32 %v396, %v461
    %v485 = vmul.f32 %v400, %v461
    %v486 = vmul.f32 %v404, %v461
    %v487 = vmul.f32 %v408, %v461
    %v488 = vmul.f32 %v412, %v461
    %v489 = vmul.f32 %v416, %v461
    %v490 = vmul.f32 %v420, %v461
    %v491 = vmul.f32 %v424, %v461
    %v492 = vmul.f32 %v428, %v461
    %v493 = vmul.f32 %v432, %v461
    %v494 = vmul.f32 %v436, %v461
    %v495 = vmul.f32 %v440, %v461
    %v496 = vmul.f32 %v444, %v461
    %v497 = vmul.f32 %v448, %v461
    %v498 = vmul.f32 %v452, %v461
    %v499 = vmul.f32 %v456, %v461
    %v500 = vadd.f32 %v268, %v462
    %v501 = vadd.f32 %v269, %v463
    %v502 = vadd.f32 %v270, %v464
    %v503 = vadd.f32 %v271, %v465
    %v504 = vadd.f32 %v272, %v466
    %v505 = vadd.f32 %v273, %v467
    %v506 = vadd.f32 %v274, %v468
    %v507 = vadd.f32 %v275, %v469
    %v508 = vadd.f32 %v276, %v470
    %v509 = vadd.f32 %v277, %v471
    %v510 = vadd.f32 %v278, %v472
    %v511 = vadd.f32 %v279, %v473
    %v512 = vadd.f32 %v280, %v474
    %v513 = vadd.f32 %v281, %v475
    %v514 = vadd.f32 %v282, %v476
    %v515 = vadd.f32 %v283, %v477
    %v516 = vadd.f32 %v284, %v478
    %v517 = vadd.f32 %v285, %v479
    %v518 = vadd.f32 %v286, %v480
    %v519 = vadd.f32 %v287, %v481
    %v520 = vadd.f32 %v288, %v482
    %v521 = vadd.f32 %v289, %v483
    %v522 = vadd.f32 %v290, %v484
    %v523 = vadd.f32 %v291, %v485
    %v524 = vadd.f32 %v292, %v486
    %v525 = vadd.f32 %v293, %v487
    %v526 = vadd.f32 %v294, %v488
    %v527 = vadd.f32 %v295, %v489
    %v528 = vadd.f32 %v296, %v490
    %v529 = vadd.f32 %v297, %v491
    %v530 = vadd.f32 %v298, %v492
    %v531 = vadd.f32 %v299, %v493
    %v532 = vadd.f32 %v300, %v494
    %v533 = vadd.f32 %v301, %v495
    %v534 = vadd.f32 %v302, %v496
    %v535 = vadd.f32 %v303, %v497
    %v536 = vadd.f32 %v304, %v498
    %v537 = vadd.f32 %v305, %v499
    %v538 = vld [vmem:[%s2] sm:$0x1]
    %v540 = vlaneseq
    %v541 = vshrl.u32 %v540, 7
    %v542 = vsub.s32 0, %v541
    %v543 = vrot.slane %v538, %v542
    %v545 = vadd.f32 %v500, %v543
    %v546 = vadd.f32 %v501, %v543
    %v547 = vadd.f32 %v502, %v543
    %v548 = vadd.f32 %v503, %v543
    %v549 = vadd.f32 %v504, %v543
    %v550 = vadd.f32 %v505, %v543
    %v551 = vadd.f32 %v506, %v543
    %v552 = vadd.f32 %v507, %v543
    %v553 = vadd.f32 %v508, %v543
    %v554 = vadd.f32 %v509, %v543
    %v555 = vadd.f32 %v510, %v543
    %v556 = vadd.f32 %v511, %v543
    %v557 = vadd.f32 %v512, %v543
    %v558 = vadd.f32 %v513, %v543
    %v559 = vadd.f32 %v514, %v543
    %v560 = vadd.f32 %v515, %v543
    %v561 = vadd.f32 %v516, %v543
    %v562 = vadd.f32 %v517, %v543
    %v563 = vadd.f32 %v518, %v543
    %v564 = vadd.f32 %v519, %v543
    %v565 = vadd.f32 %v520, %v543
    %v566 = vadd.f32 %v521, %v543
    %v567 = vadd.f32 %v522, %v543
    %v568 = vadd.f32 %v523, %v543
    %v569 = vadd.f32 %v524, %v543
    %v570 = vadd.f32 %v525, %v543
    %v571 = vadd.f32 %v526, %v543
    %v572 = vadd.f32 %v527, %v543
    %v573 = vadd.f32 %v528, %v543
    %v574 = vadd.f32 %v529, %v543
    %v575 = vadd.f32 %v530, %v543
    %v576 = vadd.f32 %v531, %v543
    %v577 = vadd.f32 %v532, %v543
    %v578 = vadd.f32 %v533, %v543
    %v579 = vadd.f32 %v534, %v543
    %v580 = vadd.f32 %v535, %v543
    %v581 = vadd.f32 %v536, %v543
    %v582 = vadd.f32 %v537, %v543
    %v583 = vmax.f32 %v545, 0.0
    %v584 = vmax.f32 %v546, 0.0
    %v585 = vmax.f32 %v547, 0.0
    %v586 = vmax.f32 %v548, 0.0
    %v587 = vmax.f32 %v549, 0.0
    %v588 = vmax.f32 %v550, 0.0
    %v589 = vmax.f32 %v551, 0.0
    %v590 = vmax.f32 %v552, 0.0
    %v591 = vmax.f32 %v553, 0.0
    %v592 = vmax.f32 %v554, 0.0
    %v593 = vmax.f32 %v555, 0.0
    %v594 = vmax.f32 %v556, 0.0
    %v595 = vmax.f32 %v557, 0.0
    %v596 = vmax.f32 %v558, 0.0
    %v597 = vmax.f32 %v559, 0.0
    %v598 = vmax.f32 %v560, 0.0
    %v599 = vmax.f32 %v561, 0.0
    %v600 = vmax.f32 %v562, 0.0
    %v601 = vmax.f32 %v563, 0.0
    %v602 = vmax.f32 %v564, 0.0
    %v603 = vmax.f32 %v565, 0.0
    %v604 = vmax.f32 %v566, 0.0
    %v605 = vmax.f32 %v567, 0.0
    %v606 = vmax.f32 %v568, 0.0
    %v607 = vmax.f32 %v569, 0.0
    %v608 = vmax.f32 %v570, 0.0
    %v609 = vmax.f32 %v571, 0.0
    %v610 = vmax.f32 %v572, 0.0
    %v611 = vmax.f32 %v573, 0.0
    %v612 = vmax.f32 %v574, 0.0
    %v613 = vmax.f32 %v575, 0.0
    %v614 = vmax.f32 %v576, 0.0
    %v615 = vmax.f32 %v577, 0.0
    %v616 = vmax.f32 %v578, 0.0
    %v617 = vmax.f32 %v579, 0.0
    %v618 = vmax.f32 %v580, 0.0
    %v619 = vmax.f32 %v581, 0.0
    %v620 = vmax.f32 %v582, 0.0
    %v621 = vld [vmem:[#allocation2] sm:$0xff]
    %v622 = vld [vmem:[#allocation2 + $0x8] sm:$0xff]
    %v623 = vld [vmem:[#allocation2 + $0x10] sm:$0xff]
    %v624 = vld [vmem:[#allocation2 + $0x18] sm:$0xff]
    %v625 = vld [vmem:[#allocation2 + $0x20] sm:$0xff]
    %v626 = vld [vmem:[#allocation2 + $0x28] sm:$0xff]
    %v627 = vld [vmem:[#allocation2 + $0x30] sm:$0xff]
    %v628 = vld [vmem:[#allocation2 + $0x38] sm:$0xff]
    %v629 = vld [vmem:[#allocation2 + $0x40] sm:$0xff]
    %v630 = vld [vmem:[#allocation2 + $0x48] sm:$0xff]
    %v631 = vld [vmem:[#allocation2 + $0x50] sm:$0xff]
    %v632 = vld [vmem:[#allocation2 + $0x58] sm:$0xff]
    %v633 = vld [vmem:[#allocation2 + $0x60] sm:$0xff]
    %v634 = vld [vmem:[#allocation2 + $0x68] sm:$0xff]
    %v635 = vld [vmem:[#allocation2 + $0x70] sm:$0xff]
    %v636 = vld [vmem:[#allocation2 + $0x78] sm:$0xff]
    %v637 = vld [vmem:[#allocation2 + $0x80] sm:$0xff]
    %v638 = vld [vmem:[#allocation2 + $0x88] sm:$0xff]
    %v639 = vld [vmem:[#allocation2 + $0x90] sm:$0xff]
    %v640 = vld [vmem:[#allocation2 + $0x98] sm:$0xff]
    %v641 = vld [vmem:[#allocation2 + $0xa0] sm:$0xff]
    %v642 = vld [vmem:[#allocation2 + $0xa8] sm:$0xff]
    %v643 = vld [vmem:[#allocation2 + $0xb0] sm:$0xff]
    %v644 = vld [vmem:[#allocation2 + $0xb8] sm:$0xff]
    %v645 = vld [vmem:[#allocation2 + $0xc0] sm:$0xff]
    %v646 = vld [vmem:[#allocation2 + $0xc8] sm:$0xff]
    %v647 = vld [vmem:[#allocation2 + $0xd0] sm:$0xff]
    %v648 = vld [vmem:[#allocation2 + $0xd8] sm:$0xff]
    %v649 = vld [vmem:[#allocation2 + $0xe0] sm:$0xff]
    %v650 = vld [vmem:[#allocation2 + $0xe8] sm:$0xff]
    %v651 = vld [vmem:[#allocation2 + $0xf0] sm:$0xff]
    %v652 = vld [vmem:[#allocation2 + $0xf8] sm:$0xff]
    %v653 = vld [vmem:[#allocation2 + $0x100] sm:$0xff]
    %v654 = vld [vmem:[#allocation2 + $0x108] sm:$0xff]
    %v655 = vld [vmem:[#allocation2 + $0x110] sm:$0xff]
    %v656 = vld [vmem:[#allocation2 + $0x118] sm:$0xff]
    %v657 = vld [vmem:[#allocation2 + $0x120] sm:$0xff]
    %v658 = vld [vmem:[#allocation2 + $0x128] sm:$0xff]
    %v659 = vld [vmem:[#allocation2 + $0x130] sm:$0xff]
    %v660 = vld [vmem:[#allocation2 + $0x138] sm:$0xff]
    %v661 = vld [vmem:[#allocation2 + $0x140] sm:$0xff]
    %v662 = vld [vmem:[#allocation2 + $0x148] sm:$0xff]
    %v663 = vld [vmem:[#allocation2 + $0x150] sm:$0xff]
    %v664 = vld [vmem:[#allocation2 + $0x158] sm:$0xff]
    %v665 = vld [vmem:[#allocation2 + $0x160] sm:$0xff]
    %v666 = vld [vmem:[#allocation2 + $0x168] sm:$0xff]
    %v667 = vld [vmem:[#allocation2 + $0x170] sm:$0xff]
    %v668 = vld [vmem:[#allocation2 + $0x178] sm:$0xff]
    %v669 = vld [vmem:[#allocation2 + $0x180] sm:$0xff]
    %v670 = vld [vmem:[#allocation2 + $0x188] sm:$0xff]
    %v671 = vld [vmem:[#allocation2 + $0x190] sm:$0xff]
    %v672 = vld [vmem:[#allocation2 + $0x198] sm:$0xff]
    %v673 = vld [vmem:[#allocation2 + $0x1a0] sm:$0xff]
    %v674 = vld [vmem:[#allocation2 + $0x1a8] sm:$0xff]
    %v675 = vld [vmem:[#allocation2 + $0x1b0] sm:$0xff]
    %v676 = vld [vmem:[#allocation2 + $0x1b8] sm:$0xff]
    %v677 = vld [vmem:[#allocation2 + $0x1c0] sm:$0xff]
    %v678 = vld [vmem:[#allocation2 + $0x1c8] sm:$0xff]
    %v679 = vld [vmem:[#allocation2 + $0x1d0] sm:$0xff]
    %v680 = vld [vmem:[#allocation2 + $0x1d8] sm:$0xff]
    %v681 = vld [vmem:[#allocation2 + $0x1e0] sm:$0xff]
    %v682 = vld [vmem:[#allocation2 + $0x1e8] sm:$0xff]
    %v683 = vld [vmem:[#allocation2 + $0x1f0] sm:$0xff]
    %v684 = vld [vmem:[#allocation2 + $0x1f8] sm:$0xff]
    %v685 = vld [vmem:[%s4] sm:$0xf]
    %v687 = vlaneseq
    %v688 = vshrl.u32 %v687, 7
    %v689 = vsub.s32 0, %v688
    %v690 = vrot.slane %v685, %v689
    %v691 = vlaneseq
    %v692 = vshrl.u32 %v691, 7
    %v693 = vsub.s32 1, %v692
    %v694 = vrot.slane %v685, %v693
    %v695 = vlaneseq
    %v696 = vshrl.u32 %v695, 7
    %v697 = vsub.s32 2, %v696
    %v698 = vrot.slane %v685, %v697
    %v699 = vlaneseq
    %v700 = vshrl.u32 %v699, 7
    %v701 = vsub.s32 3, %v700
    %v702 = vrot.slane %v685, %v701
    %707 = vmatprep.subr.mxu0 %v622
    %708 = vmatpush1.msra.mxu0 %v621
    %709 = vmatprep.subr.mxu0 %v626
    %710 = vmatpush1.msra.mxu0 %v625
    %711 = vmatprep.subr.mxu0 %v630
    %712 = vmatpush1.msra.mxu0 %v629
    %713 = vmatprep.subr.mxu0 %v634
    %714 = vmatpush1.msra.mxu0 %v633
    %715 = vmatprep.subr.mxu0 %v638
    %716 = vmatpush1.msra.mxu0 %v637
    %717 = vmatprep.subr.mxu0 %v642
    %718 = vmatpush1.msra.mxu0 %v641
    %719 = vmatprep.subr.mxu0 %v646
    %720 = vmatpush1.msra.mxu0 %v645
    %721 = vmatprep.subr.mxu0 %v650
    %722 = vmatpush1.msra.mxu0 %v649
    %723 = vmatprep.subr.mxu0 %v654
    %724 = vmatpush1.msra.mxu0 %v653
    %725 = vmatprep.subr.mxu0 %v658
    %726 = vmatpush1.msra.mxu0 %v657
    %727 = vmatprep.subr.mxu0 %v662
    %728 = vmatpush1.msra.mxu0 %v661
    %729 = vmatprep.subr.mxu0 %v666
    %730 = vmatpush1.msra.mxu0 %v665
    %731 = vmatprep.subr.mxu0 %v670
    %732 = vmatpush1.msra.mxu0 %v669
    %733 = vmatprep.subr.mxu0 %v674
    %734 = vmatpush1.msra.mxu0 %v673
    %735 = vmatprep.subr.mxu0 %v678
    %736 = vmatpush1.msra.mxu0 %v677
    %737 = vmatprep.subr.mxu0 %v682
    %738 = vmatpush1.msra.mxu0 %v681
    %739 = vmatprep.subr.mxu0 0.0
    %740 = vmatpush1.msra.mxu0 0.0
    %741 = vmatprep.subr.mxu0 0.0
    %742 = vmatpush1.msra.mxu0 0.0
    %743 = vmatprep.subr.mxu0 0.0
    %744 = vmatpush1.msra.mxu0 0.0
    %745 = vmatprep.subr.mxu0 0.0
    %746 = vmatpush1.msra.mxu0 0.0
    %747 = vmatprep.subr.mxu0 0.0
    %748 = vmatpush1.msra.mxu0 0.0
    %749 = vmatprep.subr.mxu0 0.0
    %750 = vmatpush1.msra.mxu0 0.0
    %751 = vmatprep.subr.mxu0 0.0
    %752 = vmatpush1.msra.mxu0 0.0
    %753 = vmatprep.subr.mxu0 0.0
    %754 = vmatpush1.msra.mxu0 0.0
    %755 = vmatprep.subr.mxu0 0.0
    %756 = vmatpush1.msra.mxu0 0.0
    %757 = vmatprep.subr.mxu0 0.0
    %758 = vmatpush1.msra.mxu0 0.0
    %759 = vmatprep.subr.mxu0 0.0
    %760 = vmatpush1.msra.mxu0 0.0
    %761 = vmatprep.subr.mxu0 0.0
    %762 = vmatpush1.msra.mxu0 0.0
    %763 = vmatprep.subr.mxu0 0.0
    %764 = vmatpush1.msra.mxu0 0.0
    %765 = vmatprep.subr.mxu0 0.0
    %766 = vmatpush1.msra.mxu0 0.0
    %767 = vmatprep.subr.mxu0 0.0
    %768 = vmatpush1.msra.mxu0 0.0
    %769 = vmatprep.subr.mxu0 0.0
    %770 = vmatpush1.msra.mxu0 0.0
    %771 = vmatprep.mubr.f32.mxu0 0.0
    %772 = vmatmul.mubr.f32.gmra.mrb[0].mxu0 %v583
    %v773 = vpop.f32.mrb[0].mxu0
    %v774 = vadd.f32 %v690, %v773
    %v775 = vpop.f32.mrb[0].mxu0
    %v776 = vadd.f32 %v694, %v775
    %777 = vmatprep.mubr.f32.mxu0 0.0
    %778 = vmatmul.mubr.f32.gmra.mrb[0].mxu0 %v584
    %v779 = vpop.f32.mrb[0].mxu0
    %v780 = vadd.f32 %v690, %v779
    %v781 = vpop.f32.mrb[0].mxu0
    %v782 = vadd.f32 %v694, %v781
    %783 = vmatprep.mubr.f32.mxu0 0.0
    %784 = vmatmul.mubr.f32.gmra.mrb[0].mxu0 %v585
    %v785 = vpop.f32.mrb[0].mxu0
    %v786 = vadd.f32 %v690, %v785
    %v787 = vpop.f32.mrb[0].mxu0
    %v788 = vadd.f32 %v694, %v787
    %789 = vmatprep.mubr.f32.mxu0 0.0
    %790 = vmatmul.mubr.f32.gmra.mrb[0].mxu0 %v586
    %v791 = vpop.f32.mrb[0].mxu0
    %v792 = vadd.f32 %v690, %v791
    %v793 = vpop.f32.mrb[0].mxu0
    %v794 = vadd.f32 %v694, %v793
    %795 = vmatprep.mubr.f32.mxu0 0.0
    %796 = vmatmul.mubr.f32.gmra.mrb[0].mxu0 %v587
    %v797 = vpop.f32.mrb[0].mxu0
    %v798 = vadd.f32 %v690, %v797
    %v799 = vpop.f32.mrb[0].mxu0
    %v800 = vadd.f32 %v694, %v799
    %801 = vmatprep.mubr.f32.mxu0 0.0
    %802 = vmatmul.mubr.f32.gmra.mrb[0].mxu0 %v588
    %v803 = vpop.f32.mrb[0].mxu0
    %v804 = vadd.f32 %v690, %v803
    %v805 = vpop.f32.mrb[0].mxu0
    %v806 = vadd.f32 %v694, %v805
    %807 = vmatprep.mubr.f32.mxu0 0.0
    %808 = vmatmul.mubr.f32.gmra.mrb[0].mxu0 %v589
    %v809 = vpop.f32.mrb[0].mxu0
    %v810 = vadd.f32 %v690, %v809
    %v811 = vpop.f32.mrb[0].mxu0
    %v812 = vadd.f32 %v694, %v811
    %813 = vmatprep.mubr.f32.mxu0 0.0
    %814 = vmatmul.mubr.f32.gmra.mrb[0].mxu0 %v590
    %v815 = vpop.f32.mrb[0].mxu0
    %v816 = vadd.f32 %v690, %v815
    %v817 = vpop.f32.mrb[0].mxu0
    %v818 = vadd.f32 %v694, %v817
    %819 = vmatprep.mubr.f32.mxu0 0.0
    %820 = vmatmul.mubr.f32.gmra.mrb[0].mxu0 %v591
    %v821 = vpop.f32.mrb[0].mxu0
    %v822 = vadd.f32 %v690, %v821
    %v823 = vpop.f32.mrb[0].mxu0
    %v824 = vadd.f32 %v694, %v823
    %825 = vmatprep.mubr.f32.mxu0 0.0
    %826 = vmatmul.mubr.f32.gmra.mrb[0].mxu0 %v592
    %v827 = vpop.f32.mrb[0].mxu0
    %v828 = vadd.f32 %v690, %v827
    %v829 = vpop.f32.mrb[0].mxu0
    %v830 = vadd.f32 %v694, %v829
    %831 = vmatprep.mubr.f32.mxu0 0.0
    %832 = vmatmul.mubr.f32.gmra.mrb[0].mxu0 %v593
    %v833 = vpop.f32.mrb[0].mxu0
    %v834 = vadd.f32 %v690, %v833
    %v835 = vpop.f32.mrb[0].mxu0
    %v836 = vadd.f32 %v694, %v835
    %837 = vmatprep.mubr.f32.mxu0 0.0
    %838 = vmatmul.mubr.f32.gmra.mrb[0].mxu0 %v594
    %v839 = vpop.f32.mrb[0].mxu0
    %v840 = vadd.f32 %v690, %v839
    %v841 = vpop.f32.mrb[0].mxu0
    %v842 = vadd.f32 %v694, %v841
    %843 = vmatprep.mubr.f32.mxu0 0.0
    %844 = vmatmul.mubr.f32.gmra.mrb[0].mxu0 %v595
    %v845 = vpop.f32.mrb[0].mxu0
    %v846 = vadd.f32 %v690, %v845
    %v847 = vpop.f32.mrb[0].mxu0
    %v848 = vadd.f32 %v694, %v847
    %849 = vmatprep.mubr.f32.mxu0 0.0
    %850 = vmatmul.mubr.f32.gmra.mrb[0].mxu0 %v596
    %v851 = vpop.f32.mrb[0].mxu0
    %v852 = vadd.f32 %v690, %v851
    %v853 = vpop.f32.mrb[0].mxu0
    %v854 = vadd.f32 %v694, %v853
    %855 = vmatprep.mubr.f32.mxu0 0.0
    %856 = vmatmul.mubr.f32.gmra.mrb[0].mxu0 %v597
    %v857 = vpop.f32.mrb[0].mxu0
    %v858 = vadd.f32 %v690, %v857
    %v859 = vpop.f32.mrb[0].mxu0
    %v860 = vadd.f32 %v694, %v859
    %861 = vmatprep.mubr.f32.mxu0 0.0
    %862 = vmatmul.mubr.f32.gmra.mrb[0].mxu0 %v598
    %v863 = vpop.f32.mrb[0].mxu0
    %v864 = vadd.f32 %v690, %v863
    %v865 = vpop.f32.mrb[0].mxu0
    %v866 = vadd.f32 %v694, %v865
    %867 = vmatprep.mubr.f32.mxu0 0.0
    %868 = vmatmul.mubr.f32.gmra.mrb[0].mxu0 %v599
    %v869 = vpop.f32.mrb[0].mxu0
    %v870 = vadd.f32 %v690, %v869
    %v871 = vpop.f32.mrb[0].mxu0
    %v872 = vadd.f32 %v694, %v871
    %873 = vmatprep.mubr.f32.mxu0 0.0
    %874 = vmatmul.mubr.f32.gmra.mrb[0].mxu0 %v600
    %v875 = vpop.f32.mrb[0].mxu0
    %v876 = vadd.f32 %v690, %v875
    %v877 = vpop.f32.mrb[0].mxu0
    %v878 = vadd.f32 %v694, %v877
    %879 = vmatprep.mubr.f32.mxu0 0.0
    %880 = vmatmul.mubr.f32.gmra.mrb[0].mxu0 %v601
    %v881 = vpop.f32.mrb[0].mxu0
    %v882 = vadd.f32 %v690, %v881
    %v883 = vpop.f32.mrb[0].mxu0
    %v884 = vadd.f32 %v694, %v883
    %885 = vmatprep.mubr.f32.mxu0 0.0
    %886 = vmatmul.mubr.f32.gmra.mrb[0].mxu0 %v602
    %v887 = vpop.f32.mrb[0].mxu0
    %v888 = vadd.f32 %v690, %v887
    %v889 = vpop.f32.mrb[0].mxu0
    %v890 = vadd.f32 %v694, %v889
    %891 = vmatprep.mubr.f32.mxu0 0.0
    %892 = vmatmul.mubr.f32.gmra.mrb[0].mxu0 %v603
    %v893 = vpop.f32.mrb[0].mxu0
    %v894 = vadd.f32 %v690, %v893
    %v895 = vpop.f32.mrb[0].mxu0
    %v896 = vadd.f32 %v694, %v895
    %897 = vmatprep.mubr.f32.mxu0 0.0
    %898 = vmatmul.mubr.f32.gmra.mrb[0].mxu0 %v604
    %v899 = vpop.f32.mrb[0].mxu0
    %v900 = vadd.f32 %v690, %v899
    %v901 = vpop.f32.mrb[0].mxu0
    %v902 = vadd.f32 %v694, %v901
    %903 = vmatprep.mubr.f32.mxu0 0.0
    %904 = vmatmul.mubr.f32.gmra.mrb[0].mxu0 %v605
    %v905 = vpop.f32.mrb[0].mxu0
    %v906 = vadd.f32 %v690, %v905
    %v907 = vpop.f32.mrb[0].mxu0
    %v908 = vadd.f32 %v694, %v907
    %909 = vmatprep.mubr.f32.mxu0 0.0
    %910 = vmatmul.mubr.f32.gmra.mrb[0].mxu0 %v606
    %v911 = vpop.f32.mrb[0].mxu0
    %v912 = vadd.f32 %v690, %v911
    %v913 = vpop.f32.mrb[0].mxu0
    %v914 = vadd.f32 %v694, %v913
    %915 = vmatprep.mubr.f32.mxu0 0.0
    %916 = vmatmul.mubr.f32.gmra.mrb[0].mxu0 %v607
    %v917 = vpop.f32.mrb[0].mxu0
    %v918 = vadd.f32 %v690, %v917
    %v919 = vpop.f32.mrb[0].mxu0
    %v920 = vadd.f32 %v694, %v919
    %921 = vmatprep.mubr.f32.mxu0 0.0
    %922 = vmatmul.mubr.f32.gmra.mrb[0].mxu0 %v608
    %v923 = vpop.f32.mrb[0].mxu0
    %v924 = vadd.f32 %v690, %v923
    %v925 = vpop.f32.mrb[0].mxu0
    %v926 = vadd.f32 %v694, %v925
    %927 = vmatprep.mubr.f32.mxu0 0.0
    %928 = vmatmul.mubr.f32.gmra.mrb[0].mxu0 %v609
    %v929 = vpop.f32.mrb[0].mxu0
    %v930 = vadd.f32 %v690, %v929
    %v931 = vpop.f32.mrb[0].mxu0
    %v932 = vadd.f32 %v694, %v931
    %933 = vmatprep.mubr.f32.mxu0 0.0
    %934 = vmatmul.mubr.f32.gmra.mrb[0].mxu0 %v610
    %v935 = vpop.f32.mrb[0].mxu0
    %v936 = vadd.f32 %v690, %v935
    %v937 = vpop.f32.mrb[0].mxu0
    %v938 = vadd.f32 %v694, %v937
    %939 = vmatprep.mubr.f32.mxu0 0.0
    %940 = vmatmul.mubr.f32.gmra.mrb[0].mxu0 %v611
    %v941 = vpop.f32.mrb[0].mxu0
    %v942 = vadd.f32 %v690, %v941
    %v943 = vpop.f32.mrb[0].mxu0
    %v944 = vadd.f32 %v694, %v943
    %945 = vmatprep.mubr.f32.mxu0 0.0
    %946 = vmatmul.mubr.f32.gmra.mrb[0].mxu0 %v612
    %v947 = vpop.f32.mrb[0].mxu0
    %v948 = vadd.f32 %v690, %v947
    %v949 = vpop.f32.mrb[0].mxu0
    %v950 = vadd.f32 %v694, %v949
    %951 = vmatprep.mubr.f32.mxu0 0.0
    %952 = vmatmul.mubr.f32.gmra.mrb[0].mxu0 %v613
    %v953 = vpop.f32.mrb[0].mxu0
    %v954 = vadd.f32 %v690, %v953
    %v955 = vpop.f32.mrb[0].mxu0
    %v956 = vadd.f32 %v694, %v955
    %957 = vmatprep.mubr.f32.mxu0 0.0
    %958 = vmatmul.mubr.f32.gmra.mrb[0].mxu0 %v614
    %v959 = vpop.f32.mrb[0].mxu0
    %v960 = vadd.f32 %v690, %v959
    %v961 = vpop.f32.mrb[0].mxu0
    %v962 = vadd.f32 %v694, %v961
    %963 = vmatprep.mubr.f32.mxu0 0.0
    %964 = vmatmul.mubr.f32.gmra.mrb[0].mxu0 %v615
    %v965 = vpop.f32.mrb[0].mxu0
    %v966 = vadd.f32 %v690, %v965
    %v967 = vpop.f32.mrb[0].mxu0
    %v968 = vadd.f32 %v694, %v967
    %969 = vmatprep.mubr.f32.mxu0 0.0
    %970 = vmatmul.mubr.f32.gmra.mrb[0].mxu0 %v616
    %v971 = vpop.f32.mrb[0].mxu0
    %v972 = vadd.f32 %v690, %v971
    %v973 = vpop.f32.mrb[0].mxu0
    %v974 = vadd.f32 %v694, %v973
    %975 = vmatprep.mubr.f32.mxu0 0.0
    %976 = vmatmul.mubr.f32.gmra.mrb[0].mxu0 %v617
    %v977 = vpop.f32.mrb[0].mxu0
    %v978 = vadd.f32 %v690, %v977
    %v979 = vpop.f32.mrb[0].mxu0
    %v980 = vadd.f32 %v694, %v979
    %981 = vmatprep.mubr.f32.mxu0 0.0
    %982 = vmatmul.mubr.f32.gmra.mrb[0].mxu0 %v618
    %v983 = vpop.f32.mrb[0].mxu0
    %v984 = vadd.f32 %v690, %v983
    %v985 = vpop.f32.mrb[0].mxu0
    %v986 = vadd.f32 %v694, %v985
    %987 = vmatprep.mubr.f32.mxu0 0.0
    %988 = vmatmul.mubr.f32.gmra.mrb[0].mxu0 %v619
    %v989 = vpop.f32.mrb[0].mxu0
    %v990 = vadd.f32 %v690, %v989
    %v991 = vpop.f32.mrb[0].mxu0
    %v992 = vadd.f32 %v694, %v991
    %993 = vmatprep.mubr.f32.mxu0 0.0
    %994 = vmatmul.mubr.f32.gmra.mrb[0].mxu0 %v620
    %v995 = vpop.f32.mrb[0].mxu0
    %v996 = vadd.f32 %v690, %v995
    %v997 = vpop.f32.mrb[0].mxu0
    %v998 = vadd.f32 %v694, %v997
    %999 = vdwg.mxu0
    %1000 = vmatprep.subr.mxu0 %v624
    %1001 = vmatpush1.msra.mxu0 %v623
    %1002 = vmatprep.subr.mxu0 %v628
    %1003 = vmatpush1.msra.mxu0 %v627
    %1004 = vmatprep.subr.mxu0 %v632
    %1005 = vmatpush1.msra.mxu0 %v631
    %1006 = vmatprep.subr.mxu0 %v636
    %1007 = vmatpush1.msra.mxu0 %v635
    %1008 = vmatprep.subr.mxu0 %v640
    %1009 = vmatpush1.msra.mxu0 %v639
    %1010 = vmatprep.subr.mxu0 %v644
    %1011 = vmatpush1.msra.mxu0 %v643
    %1012 = vmatprep.subr.mxu0 %v648
    %1013 = vmatpush1.msra.mxu0 %v647
    %1014 = vmatprep.subr.mxu0 %v652
    %1015 = vmatpush1.msra.mxu0 %v651
    %1016 = vmatprep.subr.mxu0 %v656
    %1017 = vmatpush1.msra.mxu0 %v655
    %1018 = vmatprep.subr.mxu0 %v660
    %1019 = vmatpush1.msra.mxu0 %v659
    %1020 = vmatprep.subr.mxu0 %v664
    %1021 = vmatpush1.msra.mxu0 %v663
    %1022 = vmatprep.subr.mxu0 %v668
    %1023 = vmatpush1.msra.mxu0 %v667
    %1024 = vmatprep.subr.mxu0 %v672
    %1025 = vmatpush1.msra.mxu0 %v671
    %1026 = vmatprep.subr.mxu0 %v676
    %1027 = vmatpush1.msra.mxu0 %v675
    %1028 = vmatprep.subr.mxu0 %v680
    %1029 = vmatpush1.msra.mxu0 %v679
    %1030 = vmatprep.subr.mxu0 %v684
    %1031 = vmatpush1.msra.mxu0 %v683
    %1032 = vmatprep.subr.mxu0 0.0
    %1033 = vmatpush1.msra.mxu0 0.0
    %1034 = vmatprep.subr.mxu0 0.0
    %1035 = vmatpush1.msra.mxu0 0.0
    %1036 = vmatprep.subr.mxu0 0.0
    %1037 = vmatpush1.msra.mxu0 0.0
    %1038 = vmatprep.subr.mxu0 0.0
    %1039 = vmatpush1.msra.mxu0 0.0
    %1040 = vmatprep.subr.mxu0 0.0
    %1041 = vmatpush1.msra.mxu0 0.0
    %1042 = vmatprep.subr.mxu0 0.0
    %1043 = vmatpush1.msra.mxu0 0.0
    %1044 = vmatprep.subr.mxu0 0.0
    %1045 = vmatpush1.msra.mxu0 0.0
    %1046 = vmatprep.subr.mxu0 0.0
    %1047 = vmatpush1.msra.mxu0 0.0
    %1048 = vmatprep.subr.mxu0 0.0
    %1049 = vmatpush1.msra.mxu0 0.0
    %1050 = vmatprep.subr.mxu0 0.0
    %1051 = vmatpush1.msra.mxu0 0.0
    %1052 = vmatprep.subr.mxu0 0.0
    %1053 = vmatpush1.msra.mxu0 0.0
    %1054 = vmatprep.subr.mxu0 0.0
    %1055 = vmatpush1.msra.mxu0 0.0
    %1056 = vmatprep.subr.mxu0 0.0
    %1057 = vmatpush1.msra.mxu0 0.0
    %1058 = vmatprep.subr.mxu0 0.0
    %1059 = vmatpush1.msra.mxu0 0.0
    %1060 = vmatprep.subr.mxu0 0.0
    %1061 = vmatpush1.msra.mxu0 0.0
    %1062 = vmatprep.subr.mxu0 0.0
    %1063 = vmatpush1.msra.mxu0 0.0
    %1064 = vmatprep.mubr.f32.mxu0 0.0
    %1065 = vmatmul.mubr.f32.gmra.mrb[0].mxu0 %v583
    %v1066 = vpop.f32.mrb[0].mxu0
    %v1067 = vadd.f32 %v698, %v1066
    %v1068 = vpop.f32.mrb[0].mxu0
    %v1069 = vadd.f32 %v702, %v1068
    %1070 = vmatprep.mubr.f32.mxu0 0.0
    %1071 = vmatmul.mubr.f32.gmra.mrb[0].mxu0 %v584
    %v1072 = vpop.f32.mrb[0].mxu0
    %v1073 = vadd.f32 %v698, %v1072
    %v1074 = vpop.f32.mrb[0].mxu0
    %v1075 = vadd.f32 %v702, %v1074
    %1076 = vmatprep.mubr.f32.mxu0 0.0
    %1077 = vmatmul.mubr.f32.gmra.mrb[0].mxu0 %v585
    %v1078 = vpop.f32.mrb[0].mxu0
    %v1079 = vadd.f32 %v698, %v1078
    %v1080 = vpop.f32.mrb[0].mxu0
    %v1081 = vadd.f32 %v702, %v1080
    %1082 = vmatprep.mubr.f32.mxu0 0.0
    %1083 = vmatmul.mubr.f32.gmra.mrb[0].mxu0 %v586
    %v1084 = vpop.f32.mrb[0].mxu0
    %v1085 = vadd.f32 %v698, %v1084
    %v1086 = vpop.f32.mrb[0].mxu0
    %v1087 = vadd.f32 %v702, %v1086
    %1088 = vmatprep.mubr.f32.mxu0 0.0
    %1089 = vmatmul.mubr.f32.gmra.mrb[0].mxu0 %v587
    %v1090 = vpop.f32.mrb[0].mxu0
    %v1091 = vadd.f32 %v698, %v1090
    %v1092 = vpop.f32.mrb[0].mxu0
    %v1093 = vadd.f32 %v702, %v1092
    %1094 = vmatprep.mubr.f32.mxu0 0.0
    %1095 = vmatmul.mubr.f32.gmra.mrb[0].mxu0 %v588
    %v1096 = vpop.f32.mrb[0].mxu0
    %v1097 = vadd.f32 %v698, %v1096
    %v1098 = vpop.f32.mrb[0].mxu0
    %v1099 = vadd.f32 %v702, %v1098
    %1100 = vmatprep.mubr.f32.mxu0 0.0
    %1101 = vmatmul.mubr.f32.gmra.mrb[0].mxu0 %v589
    %v1102 = vpop.f32.mrb[0].mxu0
    %v1103 = vadd.f32 %v698, %v1102
    %v1104 = vpop.f32.mrb[0].mxu0
    %v1105 = vadd.f32 %v702, %v1104
    %1106 = vmatprep.mubr.f32.mxu0 0.0
    %1107 = vmatmul.mubr.f32.gmra.mrb[0].mxu0 %v590
    %v1108 = vpop.f32.mrb[0].mxu0
    %v1109 = vadd.f32 %v698, %v1108
    %v1110 = vpop.f32.mrb[0].mxu0
    %v1111 = vadd.f32 %v702, %v1110
    %1112 = vmatprep.mubr.f32.mxu0 0.0
    %1113 = vmatmul.mubr.f32.gmra.mrb[0].mxu0 %v591
    %v1114 = vpop.f32.mrb[0].mxu0
    %v1115 = vadd.f32 %v698, %v1114
    %v1116 = vpop.f32.mrb[0].mxu0
    %v1117 = vadd.f32 %v702, %v1116
    %1118 = vmatprep.mubr.f32.mxu0 0.0
    %1119 = vmatmul.mubr.f32.gmra.mrb[0].mxu0 %v592
    %v1120 = vpop.f32.mrb[0].mxu0
    %v1121 = vadd.f32 %v698, %v1120
    %v1122 = vpop.f32.mrb[0].mxu0
    %v1123 = vadd.f32 %v702, %v1122
    %1124 = vmatprep.mubr.f32.mxu0 0.0
    %1125 = vmatmul.mubr.f32.gmra.mrb[0].mxu0 %v593
    %v1126 = vpop.f32.mrb[0].mxu0
    %v1127 = vadd.f32 %v698, %v1126
    %v1128 = vpop.f32.mrb[0].mxu0
    %v1129 = vadd.f32 %v702, %v1128
    %1130 = vmatprep.mubr.f32.mxu0 0.0
    %1131 = vmatmul.mubr.f32.gmra.mrb[0].mxu0 %v594
    %v1132 = vpop.f32.mrb[0].mxu0
    %v1133 = vadd.f32 %v698, %v1132
    %v1134 = vpop.f32.mrb[0].mxu0
    %v1135 = vadd.f32 %v702, %v1134
    %1136 = vmatprep.mubr.f32.mxu0 0.0
    %1137 = vmatmul.mubr.f32.gmra.mrb[0].mxu0 %v595
    %v1138 = vpop.f32.mrb[0].mxu0
    %v1139 = vadd.f32 %v698, %v1138
    %v1140 = vpop.f32.mrb[0].mxu0
    %v1141 = vadd.f32 %v702, %v1140
    %1142 = vmatprep.mubr.f32.mxu0 0.0
    %1143 = vmatmul.mubr.f32.gmra.mrb[0].mxu0 %v596
    %v1144 = vpop.f32.mrb[0].mxu0
    %v1145 = vadd.f32 %v698, %v1144
    %v1146 = vpop.f32.mrb[0].mxu0
    %v1147 = vadd.f32 %v702, %v1146
    %1148 = vmatprep.mubr.f32.mxu0 0.0
    %1149 = vmatmul.mubr.f32.gmra.mrb[0].mxu0 %v597
    %v1150 = vpop.f32.mrb[0].mxu0
    %v1151 = vadd.f32 %v698, %v1150
    %v1152 = vpop.f32.mrb[0].mxu0
    %v1153 = vadd.f32 %v702, %v1152
    %1154 = vmatprep.mubr.f32.mxu0 0.0
    %1155 = vmatmul.mubr.f32.gmra.mrb[0].mxu0 %v598
    %v1156 = vpop.f32.mrb[0].mxu0
    %v1157 = vadd.f32 %v698, %v1156
    %v1158 = vpop.f32.mrb[0].mxu0
    %v1159 = vadd.f32 %v702, %v1158
    %1160 = vmatprep.mubr.f32.mxu0 0.0
    %1161 = vmatmul.mubr.f32.gmra.mrb[0].mxu0 %v599
    %v1162 = vpop.f32.mrb[0].mxu0
    %v1163 = vadd.f32 %v698, %v1162
    %v1164 = vpop.f32.mrb[0].mxu0
    %v1165 = vadd.f32 %v702, %v1164
    %1166 = vmatprep.mubr.f32.mxu0 0.0
    %1167 = vmatmul.mubr.f32.gmra.mrb[0].mxu0 %v600
    %v1168 = vpop.f32.mrb[0].mxu0
    %v1169 = vadd.f32 %v698, %v1168
    %v1170 = vpop.f32.mrb[0].mxu0
    %v1171 = vadd.f32 %v702, %v1170
    %1172 = vmatprep.mubr.f32.mxu0 0.0
    %1173 = vmatmul.mubr.f32.gmra.mrb[0].mxu0 %v601
    %v1174 = vpop.f32.mrb[0].mxu0
    %v1175 = vadd.f32 %v698, %v1174
    %v1176 = vpop.f32.mrb[0].mxu0
    %v1177 = vadd.f32 %v702, %v1176
    %1178 = vmatprep.mubr.f32.mxu0 0.0
    %1179 = vmatmul.mubr.f32.gmra.mrb[0].mxu0 %v602
    %v1180 = vpop.f32.mrb[0].mxu0
    %v1181 = vadd.f32 %v698, %v1180
    %v1182 = vpop.f32.mrb[0].mxu0
    %v1183 = vadd.f32 %v702, %v1182
    %1184 = vmatprep.mubr.f32.mxu0 0.0
    %1185 = vmatmul.mubr.f32.gmra.mrb[0].mxu0 %v603
    %v1186 = vpop.f32.mrb[0].mxu0
    %v1187 = vadd.f32 %v698, %v1186
    %v1188 = vpop.f32.mrb[0].mxu0
    %v1189 = vadd.f32 %v702, %v1188
    %1190 = vmatprep.mubr.f32.mxu0 0.0
    %1191 = vmatmul.mubr.f32.gmra.mrb[0].mxu0 %v604
    %v1192 = vpop.f32.mrb[0].mxu0
    %v1193 = vadd.f32 %v698, %v1192
    %v1194 = vpop.f32.mrb[0].mxu0
    %v1195 = vadd.f32 %v702, %v1194
    %1196 = vmatprep.mubr.f32.mxu0 0.0
    %1197 = vmatmul.mubr.f32.gmra.mrb[0].mxu0 %v605
    %v1198 = vpop.f32.mrb[0].mxu0
    %v1199 = vadd.f32 %v698, %v1198
    %v1200 = vpop.f32.mrb[0].mxu0
    %v1201 = vadd.f32 %v702, %v1200
    %1202 = vmatprep.mubr.f32.mxu0 0.0
    %1203 = vmatmul.mubr.f32.gmra.mrb[0].mxu0 %v606
    %v1204 = vpop.f32.mrb[0].mxu0
    %v1205 = vadd.f32 %v698, %v1204
    %v1206 = vpop.f32.mrb[0].mxu0
    %v1207 = vadd.f32 %v702, %v1206
    %1208 = vmatprep.mubr.f32.mxu0 0.0
    %1209 = vmatmul.mubr.f32.gmra.mrb[0].mxu0 %v607
    %v1210 = vpop.f32.mrb[0].mxu0
    %v1211 = vadd.f32 %v698, %v1210
    %v1212 = vpop.f32.mrb[0].mxu0
    %v1213 = vadd.f32 %v702, %v1212
    %1214 = vmatprep.mubr.f32.mxu0 0.0
    %1215 = vmatmul.mubr.f32.gmra.mrb[0].mxu0 %v608
    %v1216 = vpop.f32.mrb[0].mxu0
    %v1217 = vadd.f32 %v698, %v1216
    %v1218 = vpop.f32.mrb[0].mxu0
    %v1219 = vadd.f32 %v702, %v1218
    %1220 = vmatprep.mubr.f32.mxu0 0.0
    %1221 = vmatmul.mubr.f32.gmra.mrb[0].mxu0 %v609
    %v1222 = vpop.f32.mrb[0].mxu0
    %v1223 = vadd.f32 %v698, %v1222
    %v1224 = vpop.f32.mrb[0].mxu0
    %v1225 = vadd.f32 %v702, %v1224
    %1226 = vmatprep.mubr.f32.mxu0 0.0
    %1227 = vmatmul.mubr.f32.gmra.mrb[0].mxu0 %v610
    %v1228 = vpop.f32.mrb[0].mxu0
    %v1229 = vadd.f32 %v698, %v1228
    %v1230 = vpop.f32.mrb[0].mxu0
    %v1231 = vadd.f32 %v702, %v1230
    %1232 = vmatprep.mubr.f32.mxu0 0.0
    %1233 = vmatmul.mubr.f32.gmra.mrb[0].mxu0 %v611
    %v1234 = vpop.f32.mrb[0].mxu0
    %v1235 = vadd.f32 %v698, %v1234
    %v1236 = vpop.f32.mrb[0].mxu0
    %v1237 = vadd.f32 %v702, %v1236
    %1238 = vmatprep.mubr.f32.mxu0 0.0
    %1239 = vmatmul.mubr.f32.gmra.mrb[0].mxu0 %v612
    %v1240 = vpop.f32.mrb[0].mxu0
    %v1241 = vadd.f32 %v698, %v1240
    %v1242 = vpop.f32.mrb[0].mxu0
    %v1243 = vadd.f32 %v702, %v1242
    %1244 = vmatprep.mubr.f32.mxu0 0.0
    %1245 = vmatmul.mubr.f32.gmra.mrb[0].mxu0 %v613
    %v1246 = vpop.f32.mrb[0].mxu0
    %v1247 = vadd.f32 %v698, %v1246
    %v1248 = vpop.f32.mrb[0].mxu0
    %v1249 = vadd.f32 %v702, %v1248
    %1250 = vmatprep.mubr.f32.mxu0 0.0
    %1251 = vmatmul.mubr.f32.gmra.mrb[0].mxu0 %v614
    %v1252 = vpop.f32.mrb[0].mxu0
    %v1253 = vadd.f32 %v698, %v1252
    %v1254 = vpop.f32.mrb[0].mxu0
    %v1255 = vadd.f32 %v702, %v1254
    %1256 = vmatprep.mubr.f32.mxu0 0.0
    %1257 = vmatmul.mubr.f32.gmra.mrb[0].mxu0 %v615
    %v1258 = vpop.f32.mrb[0].mxu0
    %v1259 = vadd.f32 %v698, %v1258
    %v1260 = vpop.f32.mrb[0].mxu0
    %v1261 = vadd.f32 %v702, %v1260
    %1262 = vmatprep.mubr.f32.mxu0 0.0
    %1263 = vmatmul.mubr.f32.gmra.mrb[0].mxu0 %v616
    %v1264 = vpop.f32.mrb[0].mxu0
    %v1265 = vadd.f32 %v698, %v1264
    %v1266 = vpop.f32.mrb[0].mxu0
    %v1267 = vadd.f32 %v702, %v1266
    %1268 = vmatprep.mubr.f32.mxu0 0.0
    %1269 = vmatmul.mubr.f32.gmra.mrb[0].mxu0 %v617
    %v1270 = vpop.f32.mrb[0].mxu0
    %v1271 = vadd.f32 %v698, %v1270
    %v1272 = vpop.f32.mrb[0].mxu0
    %v1273 = vadd.f32 %v702, %v1272
    %1274 = vmatprep.mubr.f32.mxu0 0.0
    %1275 = vmatmul.mubr.f32.gmra.mrb[0].mxu0 %v618
    %v1276 = vpop.f32.mrb[0].mxu0
    %v1277 = vadd.f32 %v698, %v1276
    %v1278 = vpop.f32.mrb[0].mxu0
    %v1279 = vadd.f32 %v702, %v1278
    %1280 = vmatprep.mubr.f32.mxu0 0.0
    %1281 = vmatmul.mubr.f32.gmra.mrb[0].mxu0 %v619
    %v1282 = vpop.f32.mrb[0].mxu0
    %v1283 = vadd.f32 %v698, %v1282
    %v1284 = vpop.f32.mrb[0].mxu0
    %v1285 = vadd.f32 %v702, %v1284
    %1286 = vmatprep.mubr.f32.mxu0 0.0
    %1287 = vmatmul.mubr.f32.gmra.mrb[0].mxu0 %v620
    %v1288 = vpop.f32.mrb[0].mxu0
    %v1289 = vadd.f32 %v698, %v1288
    %v1290 = vpop.f32.mrb[0].mxu0
    %v1291 = vadd.f32 %v702, %v1290
    %1292 = vdwg.mxu0
    %1293 = vst [vmem:[#allocation5] sm:$0xff] %v774
    %1294 = vst [vmem:[#allocation5 + $0x8] sm:$0xff] %v776
    %1295 = vst [vmem:[#allocation5 + $0x10] sm:$0xff] %v1067
    %1296 = vst [vmem:[#allocation5 + $0x18] sm:$0xff] %v1069
    %1297 = vst [vmem:[#allocation5 + $0x20] sm:$0xff] %v780
    %1298 = vst [vmem:[#allocation5 + $0x28] sm:$0xff] %v782
    %1299 = vst [vmem:[#allocation5 + $0x30] sm:$0xff] %v1073
    %1300 = vst [vmem:[#allocation5 + $0x38] sm:$0xff] %v1075
    %1301 = vst [vmem:[#allocation5 + $0x40] sm:$0xff] %v786
    %1302 = vst [vmem:[#allocation5 + $0x48] sm:$0xff] %v788
    %1303 = vst [vmem:[#allocation5 + $0x50] sm:$0xff] %v1079
    %1304 = vst [vmem:[#allocation5 + $0x58] sm:$0xff] %v1081
    %1305 = vst [vmem:[#allocation5 + $0x60] sm:$0xff] %v792
    %1306 = vst [vmem:[#allocation5 + $0x68] sm:$0xff] %v794
    %1307 = vst [vmem:[#allocation5 + $0x70] sm:$0xff] %v1085
    %1308 = vst [vmem:[#allocation5 + $0x78] sm:$0xff] %v1087
    %1309 = vst [vmem:[#allocation5 + $0x80] sm:$0xff] %v798
    %1310 = vst [vmem:[#allocation5 + $0x88] sm:$0xff] %v800
    %1311 = vst [vmem:[#allocation5 + $0x90] sm:$0xff] %v1091
    %1312 = vst [vmem:[#allocation5 + $0x98] sm:$0xff] %v1093
    %1313 = vst [vmem:[#allocation5 + $0xa0] sm:$0xff] %v804
    %1314 = vst [vmem:[#allocation5 + $0xa8] sm:$0xff] %v806
    %1315 = vst [vmem:[#allocation5 + $0xb0] sm:$0xff] %v1097
    %1316 = vst [vmem:[#allocation5 + $0xb8] sm:$0xff] %v1099
    %1317 = vst [vmem:[#allocation5 + $0xc0] sm:$0xff] %v810
    %1318 = vst [vmem:[#allocation5 + $0xc8] sm:$0xff] %v812
    %1319 = vst [vmem:[#allocation5 + $0xd0] sm:$0xff] %v1103
    %1320 = vst [vmem:[#allocation5 + $0xd8] sm:$0xff] %v1105
    %1321 = vst [vmem:[#allocation5 + $0xe0] sm:$0xff] %v816
    %1322 = vst [vmem:[#allocation5 + $0xe8] sm:$0xff] %v818
    %1323 = vst [vmem:[#allocation5 + $0xf0] sm:$0xff] %v1109
    %1324 = vst [vmem:[#allocation5 + $0xf8] sm:$0xff] %v1111
    %1325 = vst [vmem:[#allocation5 + $0x100] sm:$0xff] %v822
    %1326 = vst [vmem:[#allocation5 + $0x108] sm:$0xff] %v824
    %1327 = vst [vmem:[#allocation5 + $0x110] sm:$0xff] %v1115
    %1328 = vst [vmem:[#allocation5 + $0x118] sm:$0xff] %v1117
    %1329 = vst [vmem:[#allocation5 + $0x120] sm:$0xff] %v828
    %1330 = vst [vmem:[#allocation5 + $0x128] sm:$0xff] %v830
    %1331 = vst [vmem:[#allocation5 + $0x130] sm:$0xff] %v1121
    %1332 = vst [vmem:[#allocation5 + $0x138] sm:$0xff] %v1123
    %1333 = vst [vmem:[#allocation5 + $0x140] sm:$0xff] %v834
    %1334 = vst [vmem:[#allocation5 + $0x148] sm:$0xff] %v836
    %1335 = vst [vmem:[#allocation5 + $0x150] sm:$0xff] %v1127
    %1336 = vst [vmem:[#allocation5 + $0x158] sm:$0xff] %v1129
    %1337 = vst [vmem:[#allocation5 + $0x160] sm:$0xff] %v840
    %1338 = vst [vmem:[#allocation5 + $0x168] sm:$0xff] %v842
    %1339 = vst [vmem:[#allocation5 + $0x170] sm:$0xff] %v1133
    %1340 = vst [vmem:[#allocation5 + $0x178] sm:$0xff] %v1135
    %1341 = vst [vmem:[#allocation5 + $0x180] sm:$0xff] %v846
    %1342 = vst [vmem:[#allocation5 + $0x188] sm:$0xff] %v848
    %1343 = vst [vmem:[#allocation5 + $0x190] sm:$0xff] %v1139
    %1344 = vst [vmem:[#allocation5 + $0x198] sm:$0xff] %v1141
    %1345 = vst [vmem:[#allocation5 + $0x1a0] sm:$0xff] %v852
    %1346 = vst [vmem:[#allocation5 + $0x1a8] sm:$0xff] %v854
    %1347 = vst [vmem:[#allocation5 + $0x1b0] sm:$0xff] %v1145
    %1348 = vst [vmem:[#allocation5 + $0x1b8] sm:$0xff] %v1147
    %1349 = vst [vmem:[#allocation5 + $0x1c0] sm:$0xff] %v858
    %1350 = vst [vmem:[#allocation5 + $0x1c8] sm:$0xff] %v860
    %1351 = vst [vmem:[#allocation5 + $0x1d0] sm:$0xff] %v1151
    %1352 = vst [vmem:[#allocation5 + $0x1d8] sm:$0xff] %v1153
    %1353 = vst [vmem:[#allocation5 + $0x1e0] sm:$0xff] %v864
    %1354 = vst [vmem:[#allocation5 + $0x1e8] sm:$0xff] %v866
    %1355 = vst [vmem:[#allocation5 + $0x1f0] sm:$0xff] %v1157
    %1356 = vst [vmem:[#allocation5 + $0x1f8] sm:$0xff] %v1159
    %1357 = vst [vmem:[#allocation5 + $0x200] sm:$0xff] %v870
    %1358 = vst [vmem:[#allocation5 + $0x208] sm:$0xff] %v872
    %1359 = vst [vmem:[#allocation5 + $0x210] sm:$0xff] %v1163
    %1360 = vst [vmem:[#allocation5 + $0x218] sm:$0xff] %v1165
    %1361 = vst [vmem:[#allocation5 + $0x220] sm:$0xff] %v876
    %1362 = vst [vmem:[#allocation5 + $0x228] sm:$0xff] %v878
    %1363 = vst [vmem:[#allocation5 + $0x230] sm:$0xff] %v1169
    %1364 = vst [vmem:[#allocation5 + $0x238] sm:$0xff] %v1171
    %1365 = vst [vmem:[#allocation5 + $0x240] sm:$0xff] %v882
    %1366 = vst [vmem:[#allocation5 + $0x248] sm:$0xff] %v884
    %1367 = vst [vmem:[#allocation5 + $0x250] sm:$0xff] %v1175
    %1368 = vst [vmem:[#allocation5 + $0x258] sm:$0xff] %v1177
    %1369 = vst [vmem:[#allocation5 + $0x260] sm:$0xff] %v888
    %1370 = vst [vmem:[#allocation5 + $0x268] sm:$0xff] %v890
    %1371 = vst [vmem:[#allocation5 + $0x270] sm:$0xff] %v1181
    %1372 = vst [vmem:[#allocation5 + $0x278] sm:$0xff] %v1183
    %1373 = vst [vmem:[#allocation5 + $0x280] sm:$0xff] %v894
    %1374 = vst [vmem:[#allocation5 + $0x288] sm:$0xff] %v896
    %1375 = vst [vmem:[#allocation5 + $0x290] sm:$0xff] %v1187
    %1376 = vst [vmem:[#allocation5 + $0x298] sm:$0xff] %v1189
    %1377 = vst [vmem:[#allocation5 + $0x2a0] sm:$0xff] %v900
    %1378 = vst [vmem:[#allocation5 + $0x2a8] sm:$0xff] %v902
    %1379 = vst [vmem:[#allocation5 + $0x2b0] sm:$0xff] %v1193
    %1380 = vst [vmem:[#allocation5 + $0x2b8] sm:$0xff] %v1195
    %1381 = vst [vmem:[#allocation5 + $0x2c0] sm:$0xff] %v906
    %1382 = vst [vmem:[#allocation5 + $0x2c8] sm:$0xff] %v908
    %1383 = vst [vmem:[#allocation5 + $0x2d0] sm:$0xff] %v1199
    %1384 = vst [vmem:[#allocation5 + $0x2d8] sm:$0xff] %v1201
    %1385 = vst [vmem:[#allocation5 + $0x2e0] sm:$0xff] %v912
    %1386 = vst [vmem:[#allocation5 + $0x2e8] sm:$0xff] %v914
    %1387 = vst [vmem:[#allocation5 + $0x2f0] sm:$0xff] %v1205
    %1388 = vst [vmem:[#allocation5 + $0x2f8] sm:$0xff] %v1207
    %1389 = vst [vmem:[#allocation5 + $0x300] sm:$0xff] %v918
    %1390 = vst [vmem:[#allocation5 + $0x308] sm:$0xff] %v920
    %1391 = vst [vmem:[#allocation5 + $0x310] sm:$0xff] %v1211
    %1392 = vst [vmem:[#allocation5 + $0x318] sm:$0xff] %v1213
    %1393 = vst [vmem:[#allocation5 + $0x320] sm:$0xff] %v924
    %1394 = vst [vmem:[#allocation5 + $0x328] sm:$0xff] %v926
    %1395 = vst [vmem:[#allocation5 + $0x330] sm:$0xff] %v1217
    %1396 = vst [vmem:[#allocation5 + $0x338] sm:$0xff] %v1219
    %1397 = vst [vmem:[#allocation5 + $0x340] sm:$0xff] %v930
    %1398 = vst [vmem:[#allocation5 + $0x348] sm:$0xff] %v932
    %1399 = vst [vmem:[#allocation5 + $0x350] sm:$0xff] %v1223
    %1400 = vst [vmem:[#allocation5 + $0x358] sm:$0xff] %v1225
    %1401 = vst [vmem:[#allocation5 + $0x360] sm:$0xff] %v936
    %1402 = vst [vmem:[#allocation5 + $0x368] sm:$0xff] %v938
    %1403 = vst [vmem:[#allocation5 + $0x370] sm:$0xff] %v1229
    %1404 = vst [vmem:[#allocation5 + $0x378] sm:$0xff] %v1231
    %1405 = vst [vmem:[#allocation5 + $0x380] sm:$0xff] %v942
    %1406 = vst [vmem:[#allocation5 + $0x388] sm:$0xff] %v944
    %1407 = vst [vmem:[#allocation5 + $0x390] sm:$0xff] %v1235
    %1408 = vst [vmem:[#allocation5 + $0x398] sm:$0xff] %v1237
    %1409 = vst [vmem:[#allocation5 + $0x3a0] sm:$0xff] %v948
    %1410 = vst [vmem:[#allocation5 + $0x3a8] sm:$0xff] %v950
    %1411 = vst [vmem:[#allocation5 + $0x3b0] sm:$0xff] %v1241
    %1412 = vst [vmem:[#allocation5 + $0x3b8] sm:$0xff] %v1243
    %1413 = vst [vmem:[#allocation5 + $0x3c0] sm:$0xff] %v954
    %1414 = vst [vmem:[#allocation5 + $0x3c8] sm:$0xff] %v956
    %1415 = vst [vmem:[#allocation5 + $0x3d0] sm:$0xff] %v1247
    %1416 = vst [vmem:[#allocation5 + $0x3d8] sm:$0xff] %v1249
    %1417 = vst [vmem:[#allocation5 + $0x3e0] sm:$0xff] %v960
    %1418 = vst [vmem:[#allocation5 + $0x3e8] sm:$0xff] %v962
    %1419 = vst [vmem:[#allocation5 + $0x3f0] sm:$0xff] %v1253
    %1420 = vst [vmem:[#allocation5 + $0x3f8] sm:$0xff] %v1255
    %1421 = vst [vmem:[#allocation5 + $0x400] sm:$0xff] %v966
    %1422 = vst [vmem:[#allocation5 + $0x408] sm:$0xff] %v968
    %1423 = vst [vmem:[#allocation5 + $0x410] sm:$0xff] %v1259
    %1424 = vst [vmem:[#allocation5 + $0x418] sm:$0xff] %v1261
    %1425 = vst [vmem:[#allocation5 + $0x420] sm:$0xff] %v972
    %1426 = vst [vmem:[#allocation5 + $0x428] sm:$0xff] %v974
    %1427 = vst [vmem:[#allocation5 + $0x430] sm:$0xff] %v1265
    %1428 = vst [vmem:[#allocation5 + $0x438] sm:$0xff] %v1267
    %1429 = vst [vmem:[#allocation5 + $0x440] sm:$0xff] %v978
    %1430 = vst [vmem:[#allocation5 + $0x448] sm:$0xff] %v980
    %1431 = vst [vmem:[#allocation5 + $0x450] sm:$0xff] %v1271
    %1432 = vst [vmem:[#allocation5 + $0x458] sm:$0xff] %v1273
    %1433 = vst [vmem:[#allocation5 + $0x460] sm:$0xff] %v984
    %1434 = vst [vmem:[#allocation5 + $0x468] sm:$0xff] %v986
    %1435 = vst [vmem:[#allocation5 + $0x470] sm:$0xff] %v1277
    %1436 = vst [vmem:[#allocation5 + $0x478] sm:$0xff] %v1279
    %1437 = vst [vmem:[#allocation5 + $0x480] sm:$0xff] %v990
    %1438 = vst [vmem:[#allocation5 + $0x488] sm:$0xff] %v992
    %1439 = vst [vmem:[#allocation5 + $0x490] sm:$0xff] %v1283
    %1440 = vst [vmem:[#allocation5 + $0x498] sm:$0xff] %v1285
    %1441 = vst [vmem:[#allocation5 + $0x4a0] sm:$0xff] %v996
    %1442 = vst [vmem:[#allocation5 + $0x4a8] sm:$0xff] %v998
    %1443 = vst [vmem:[#allocation5 + $0x4b0] sm:$0xff] %v1289
    %1444 = vst [vmem:[#allocation5 + $0x4b8] sm:$0xff] %v1291
    // Predicated region
    $region26: #{tpu_custom_call.1} parent=1 // pred_check
      _
    $region27: #{tpu_custom_call.1} parent=1 // pred_check_branch
      %1446 = sbr.rel (0) target = $region29
    $region28: #{tpu_custom_call.1} parent=1 // pred_region
      %s1448 = ssub.s32 19456, 19456
      %1449 = vsyncadd [#allocation4], %s1448
      %s1450 = sshll.u32 [#allocation5], 4
      %s1451 = int_to_ptr.vmem [resolvable:$true] %s1450
      %1456 = dma.vmem_to_hbm [thread:$0]  %s1451, 19456, %s5, [#allocation4], 512, 512, 32
    $region29: #{tpu_custom_call.1} parent=1 // pred_fallthru
      _
    // Predicated region
    $region30: #{tpu_custom_call.1} parent=1 // pred_check
      _
    $region31: #{tpu_custom_call.1} parent=1 // pred_check_branch
      %1458 = sbr.rel (0) target = $region33
    $region32: #{tpu_custom_call.1} parent=1 // pred_region
      %1459 = dma.done [#allocation4], 19456
    $region33: #{tpu_custom_call.1} parent=1 // pred_fallthru
      _
    %1460 = vsyncpa [#allocation3], 1
    %1461 = vsyncpa [#allocation4], 1

</llo_original>
